<compile_context>
chip_gen: v6e
topology: v6e:2x2x1
jax: 0.10.0
libtpu: 0.0.40
codegen_flags: <defaults>
</compile_context>

<pallas_src>
import jax
import jax.numpy as jnp
from jax.experimental import pallas as pl
from jax.experimental.pallas import tpu as pltpu

_LANES = 128
_SUBLANES = 8


def _affine_kernel(params_ref, x_ref, o_ref):
    # params_ref: (2,) f32 in SMEM -> [w, b]; x_ref/o_ref: (tile_rows, 128) VMEM.
    w = params_ref[0]
    b = params_ref[1]
    o_ref[...] = x_ref[...] * w + b


def _choose_tile_rows(rows):
    # Largest tile (multiple of 8 sublanes) up to 2048 rows x 128 lanes
    # (1 MiB f32 per buffer) without over-padding tiny batches.
    for tr in (2048, 1024, 512, 256, 128, 64, 32, 16, 8):
        if rows >= tr:
            return tr
    return _SUBLANES


def generator_forward(x, weight, bias):
    """nn.Linear(1, 1): x (batch, 1) f32, weight (1, 1), bias (1,) -> (batch, 1)."""
    batch, in_f = x.shape
    assert in_f == 1 and weight.shape == (1, 1) and bias.shape == (1,)
    dtype = x.dtype

    # Lane-dense reshape: (batch, 1) -> (padded_rows, 128).
    rows = pl.cdiv(batch, _LANES)
    tile_rows = _choose_tile_rows(rows)
    padded_rows = pl.cdiv(rows, tile_rows) * tile_rows
    padded_n = padded_rows * _LANES

    flat = jnp.pad(x.reshape(-1), (0, padded_n - batch))
    x2d = flat.reshape(padded_rows, _LANES)

    # Pack [w, b] into one small SMEM scalar array.
    params = jnp.concatenate([weight.reshape(-1), bias.reshape(-1)]).astype(dtype)

    grid = (padded_rows // tile_rows,)
    y2d = pl.pallas_call(
        _affine_kernel,
        out_shape=jax.ShapeDtypeStruct((padded_rows, _LANES), dtype),
        grid=grid,
        in_specs=[
            pl.BlockSpec(memory_space=pltpu.MemorySpace.SMEM),       # [w, b] scalars
            pl.BlockSpec((tile_rows, _LANES), lambda i: (i, 0)),     # x row tile
        ],
        out_specs=pl.BlockSpec((tile_rows, _LANES), lambda i: (i, 0)),
        compiler_params=pltpu.CompilerParams(
            dimension_semantics=("parallel",),
        ),
    )(params, x2d)

    return y2d.reshape(-1)[:batch].reshape(batch, 1)


def init_generator_params(key):
    # nn.init.normal_(weight, mean=1.0, std=0.1); nn.init.constant_(bias, 1.0)
    weight = 1.0 + 0.1 * jax.random.normal(key, (1, 1), dtype=jnp.float32)
    bias = jnp.ones((1,), dtype=jnp.float32)
    return weight, bias


if __name__ == "__main__":
    key = jax.random.PRNGKey(0)
    k_param, k_x1, k_x2 = jax.random.split(key, 3)

    weight, bias = init_generator_params(k_param)

    # Small batch (single tile) and a non-multiple batch (exercises padding +
    # a multi-row slab), both checked against the plain-JAX nn.Linear reference.
    for batch, kx in ((8, k_x1), (2053, k_x2)):
        x = jax.random.normal(kx, (batch, 1), dtype=jnp.float32)
        y = jax.block_until_ready(generator_forward(x, weight, bias))
        y_ref = x @ weight.T + bias
        assert y.shape == (batch, 1)
        assert jnp.allclose(y, y_ref, atol=1e-6), (batch, y, y_ref)

    print("KERNEL_OK")
</pallas_src>

<mosaic_0001>
module attributes {stable_mosaic.version = 11 : i64} {
  func.func @_affine_kernel(%arg0: i32, %arg1: memref<2xf32, #tpu.memory_space<smem>>, %arg2: memref<8x128xf32, #tpu.memory_space<vmem>>, %arg3: memref<8x128xf32, #tpu.memory_space<vmem>>) attributes {dimension_semantics = [#tpu.dimension_semantics<parallel>], iteration_bounds = array<i64: 1>, scalar_prefetch = 0 : i64, scratch_operands = 0 : i64, tpu.core_type = #tpu.core_type<tc>, window_params = [{transform_indices = @transform_0, window_bounds = array<i64: 2>}, {transform_indices = @transform_1, window_bounds = array<i64: 8, 128>}, {transform_indices = @transform_2, window_bounds = array<i64: 8, 128>}]} {
    %c0 = arith.constant 0 : index
    %0 = memref.load %arg1[%c0] : memref<2xf32, #tpu.memory_space<smem>>
    %c1 = arith.constant 1 : index
    %1 = memref.load %arg1[%c1] : memref<2xf32, #tpu.memory_space<smem>>
    %c0_0 = arith.constant 0 : index
    %c0_1 = arith.constant 0 : index
    %2 = vector.load %arg2[%c0_0, %c0_1] : memref<8x128xf32, #tpu.memory_space<vmem>>, vector<8x128xf32>
    %3 = vector.broadcast %0 : f32 to vector<8x128xf32>
    %4 = arith.mulf %2, %3 : vector<8x128xf32>
    %5 = vector.broadcast %1 : f32 to vector<8x128xf32>
    %6 = arith.addf %4, %5 : vector<8x128xf32>
    %c0_2 = arith.constant 0 : index
    %c0_3 = arith.constant 0 : index
    %7 = vector.load %arg3[%c0_2, %c0_3] : memref<8x128xf32, #tpu.memory_space<vmem>>, vector<8x128xf32>
    tpu.vector_store %arg3[%c0_2, %c0_3], %6 {strides = array<i32>} : memref<8x128xf32, #tpu.memory_space<vmem>>, vector<8x128xf32>,
    return
  }
  func.func @transform_0(%arg0: i32) -> i32 {
    %c0_i32 = arith.constant 0 : i32
    %c0_i32_0 = arith.constant 0 : i32
    return %c0_i32 : i32
  }
  func.func @transform_1(%arg0: i32) -> (i32, i32) {
    %c0_i32 = arith.constant 0 : i32
    %c0_i32_0 = arith.constant 0 : i32
    return %arg0, %c0_i32 : i32, i32
  }
  func.func @transform_2(%arg0: i32) -> (i32, i32) {
    %c0_i32 = arith.constant 0 : i32
    %c0_i32_0 = arith.constant 0 : i32
    return %arg0, %c0_i32 : i32, i32
  }
}

</mosaic_0001>

<llo_original>
// kernel: tpu_custom_call.1
$region0: #{tpu_custom_call.1}
  #allocation0 [shape = 'u32[]', space=smem, size = 0x4, offset = 0x4, fixed_abs, tag = 'smem constant byte address 0x4 - core index']
  #allocation1 [shape = 'u32[144,128]{1,0:T(1,128)}', space=vmem, size = 0x12000, scoped, tag = 'internal scratch']
  %s0 = inlined_call_operand.hbm [shape: f32[2], index: 0, kind: input, shape index: {}]
  %s1 = inlined_call_operand.hbm [shape: f32[8,128], index: 1, kind: input, shape index: {}]
  %s2 = inlined_call_operand.hbm [shape: f32[8,128], index: 2, kind: output, shape index: {}]
  %s3 = sld [smem:[#allocation0]]
  $region26: #{tpu_custom_call.1} parent=0
    _
  %s5 = ssub.s32 1, %s3
  %s6 = scalar_select 0, %s5, %s3
  $region1: #{tpu_custom_call.1} parent=0
    #allocation2 [shape = 'u8[512]{0}', space=smem, size = 0x200, scoped, tag = 'input window, operand 0, single buffered']
    #allocation3 [shape = 's32[1]{0}', space=sflag, size = 0x4, scoped, tag = 'scoped memory for tpu_custom_call.1']
    #allocation4 [shape = 's32[1]{0}', space=sflag, size = 0x4, scoped, tag = 'scoped memory for tpu_custom_call.1']
    #allocation5 [shape = 's32[1]{0}', space=sflag, size = 0x4, scoped, tag = 'scoped memory for tpu_custom_call.1']
    #allocation6 [shape = 'u8[4096]{0}', space=vmem, size = 0x1000, scoped, tag = 'input window, operand 1, single buffered']
    #allocation7 [shape = 'u8[4096]{0}', space=vmem, size = 0x1000, scoped, tag = 'output window, operand 0, single buffered']
    %7 = vsyncpa [#allocation5], 0
    %8 = vsyncpa [#allocation3], 0
    %9 = vsyncpa [#allocation4], 0
    // Predicated region
    $region2: #{tpu_custom_call.1} parent=1 // pred_check
      _
    $region3: #{tpu_custom_call.1} parent=1 // pred_check_branch
      %11 = sbr.rel (0) target = $region5
    $region4: #{tpu_custom_call.1} parent=1 // pred_region
      %s13 = ssub.s32 16, 16
      %14 = vsyncadd [#allocation5], %s13
      %17 = dma.hbm_to_smem %s0, 16, [#allocation2], [#allocation5]
    $region5: #{tpu_custom_call.1} parent=1 // pred_fallthru
      _
    // Predicated region
    $region6: #{tpu_custom_call.1} parent=1 // pred_check
      _
    $region7: #{tpu_custom_call.1} parent=1 // pred_check_branch
      %19 = sbr.rel (0) target = $region9
    $region8: #{tpu_custom_call.1} parent=1 // pred_region
      %s21 = ssub.s32 128, 128
      %22 = vsyncadd [#allocation3], %s21
      %s24 = sshll.u32 [#allocation6], 4
      %s25 = int_to_ptr.vmem [resolvable:$true] %s24
      %27 = dma.hbm_to_vmem [thread:$0]  %s1, 128, %s25, [#allocation3]
    $region9: #{tpu_custom_call.1} parent=1 // pred_fallthru
      _
    // Predicated region
    $region10: #{tpu_custom_call.1} parent=1 // pred_check
      _
    $region11: #{tpu_custom_call.1} parent=1 // pred_check_branch
      %29 = sbr.rel (0) target = $region13
    $region12: #{tpu_custom_call.1} parent=1 // pred_region
      %30 = dma.done [#allocation5], 16
    $region13: #{tpu_custom_call.1} parent=1 // pred_fallthru
      _
    // Predicated region
    $region14: #{tpu_custom_call.1} parent=1 // pred_check
      _
    $region15: #{tpu_custom_call.1} parent=1 // pred_check_branch
      %32 = sbr.rel (0) target = $region17
    $region16: #{tpu_custom_call.1} parent=1 // pred_region
      %33 = dma.done [#allocation3], 128
    $region17: #{tpu_custom_call.1} parent=1 // pred_fallthru
      _
    %34 = sfence
    %s35 = sld [smem:[#allocation2]]
    %s36 = sld [smem:[#allocation2 + $0x1]]
    %v37 = vld [vmem:[#allocation6] sm:$0xff]
    %v38 = vstv %s35
    %v39 = vmul.f32 %v37, %v38
    %v40 = vstv %s36
    %v41 = vadd.f32 %v39, %v40
    %42 = vst [vmem:[#allocation7] sm:$0xff] %v41
    // Predicated region
    $region18: #{tpu_custom_call.1} parent=1 // pred_check
      _
    $region19: #{tpu_custom_call.1} parent=1 // pred_check_branch
      %44 = sbr.rel (0) target = $region21
    $region20: #{tpu_custom_call.1} parent=1 // pred_region
      %s46 = ssub.s32 128, 128
      %47 = vsyncadd [#allocation4], %s46
      %s49 = sshll.u32 [#allocation7], 4
      %s50 = int_to_ptr.vmem [resolvable:$true] %s49
      %52 = dma.vmem_to_hbm [thread:$0]  %s50, 128, %s2, [#allocation4]
    $region21: #{tpu_custom_call.1} parent=1 // pred_fallthru
      _
    // Predicated region
    $region22: #{tpu_custom_call.1} parent=1 // pred_check
      _
    $region23: #{tpu_custom_call.1} parent=1 // pred_check_branch
      %54 = sbr.rel (0) target = $region25
    $region24: #{tpu_custom_call.1} parent=1 // pred_region
      %55 = dma.done [#allocation4], 128
    $region25: #{tpu_custom_call.1} parent=1 // pred_fallthru
      _
    %56 = vsyncpa [#allocation3], 1
    %57 = vsyncpa [#allocation4], 1
    %58 = vsyncpa [#allocation5], 1

</llo_original>
